<compile_context>
chip_gen: v6e
topology: v6e:2x2x1
jax: 0.10.0
libtpu: 0.0.40
codegen_flags: <defaults>
</compile_context>

<pallas_src>
import functools

import jax
import jax.numpy as jnp
from jax import lax
from jax.experimental import pallas as pl
from jax.experimental.pallas import tpu as pltpu


def _kca_kernel(x_ref, xt_ref, out_ref, xbox_ref, *, w, tile_n):
    # x_ref:    (1, C, N)  features of one batch element, resident across the
    #                      column sweep (block index constant in axis 1).
    # xt_ref:   (1, N, C)  same features, pixel-major layout (kept as an input
    #                      for a guaranteed-supported kn^T; costs one small,
    #                      lane-padded resident buffer — accepted trade-off).
    # out_ref:  (1, C, tile_n) output tile for this column step.
    # xbox_ref: (C, N) VMEM scratch holding the 3x3 box-summed features.
    j = pl.program_id(1)
    x = x_ref[0]                                     # (C, N)
    xt = xt_ref[0]                                   # (N, C)
    n = x.shape[1]

    # Per-pixel 1x1 kernels, L2-normalised over channels.  Computed in both
    # layouts (O(C*N) work, recomputed each column step so both grid axes can
    # stay "parallel" / megacore-safe — cost is ~1/tile_n of the matmuls).
    k = x + 1e-7                                     # (C, N)
    kt = xt + 1e-7                                   # (N, C)
    kn = k * lax.rsqrt(jnp.sum(k * k, axis=0, keepdims=True))       # (C, N)
    knt = kt * lax.rsqrt(jnp.sum(kt * kt, axis=1, keepdims=True))   # (N, C)

    # F.avg_pool2d(., 3, 1, pad=1) * 9 == zero-padded 3x3 box sum over the
    # pixel axis.  Hoisted through the first matmul by linearity, so it runs
    # on the small (C, N) block: separable ±1 / ±W lane shifts (pltpu.roll,
    # XLU) with (1, N) image-border masks — no (N, N) temporaries at all.
    lane = lax.broadcasted_iota(jnp.int32, (1, n), 1)
    col = lane % w                                   # x-coordinate of pixel p
    left = jnp.where(col > 0, pltpu.roll(x, 1, 1), 0.0)              # p-1
    right = jnp.where(col < w - 1, pltpu.roll(x, n - 1, 1), 0.0)     # p+1
    hsum = x + left + right
    up = jnp.where(lane >= w, pltpu.roll(hsum, w, 1), 0.0)           # p-w
    down = jnp.where(lane < n - w, pltpu.roll(hsum, n - w, 1), 0.0)  # p+w
    xbox_ref[...] = hsum + up + down                 # (C, N)

    # This column step's pixel window (aligned, lane-dense slice of scratch).
    start = pl.multiple_of(j * tile_n, tile_n)
    xb = xbox_ref[:, pl.ds(start, tile_n)]           # (C, tile_n)

    # F.conv2d with the per-pixel kernels (+ hoisted box sum):
    #   s[j, p] = <kn_j, boxsum(x)_p>
    s = jnp.dot(knt, xb, preferred_element_type=jnp.float32)         # (N, tile_n)

    # Softmax over the patch axis j (axis 0).  The 1/sum is deferred past the
    # conv_transpose matmul (it is constant along the contracted axis), so the
    # exact divide touches only a (1, tile_n) vector.
    m = jnp.max(s, axis=0, keepdims=True)                            # (1, tile_n)
    e = jnp.exp(s - m)                                               # (N, tile_n)
    inv_denom = 1.0 / jnp.sum(e, axis=0, keepdims=True)              # exact

    # F.conv_transpose2d(att, kernels, pad=1): out[c, p] = sum_j kn[c,j] att[j,p]
    num = jnp.dot(kn, e, preferred_element_type=jnp.float32)         # (C, tile_n)
    out_ref[0] = (num * inv_denom).astype(out_ref.dtype)


def _pick_tile_n(n, cap=512):
    """Largest multiple of 128 that divides n and is <= cap (else n)."""
    if n % 128 != 0:
        return n
    best = n
    t = 128
    while t <= min(n, cap):
        if n % t == 0:
            best = t
        t += 128
    return best


def knowledge_consistent_attention(foreground, masks, ratio,
                                   *, patch_size=3, propagate_size=3,
                                   tile_n=None):
    """First-call forward of KnowledgeConsistentAttention.

    foreground: (B, C, H, W) float32, masks: (B, 1, H, W), ratio: (1,).
    `masks` and `ratio` only enter through the cross-call recurrence
    (att_scores_prev / masks_prev), which is skipped on the first call.
    """
    del masks, ratio
    # TODO(synk): the stateful att_scores_prev/masks_prev recurrence (which
    # uses `ratio`, `masks` and F.interpolate) is cross-call hidden module
    # state, not part of this single-call forward output; not reproduced here.
    b, c, h, w = foreground.shape
    n = h * w

    if tile_n is None:
        tile_n = _pick_tile_n(n)
    if n % tile_n != 0 or (tile_n % 128 != 0 and tile_n != n):
        tile_n = n                                   # fallback: single column tile
    num_tiles = n // tile_n

    x = foreground.reshape(b, c, n).astype(jnp.float32)              # (B, C, N)
    xt = jnp.swapaxes(x, 1, 2)                                       # (B, N, C)

    # Grid (batch, column-tile), both "parallel": every output tile is fully
    # independent (softmax is over axis 0), so megacore may split either axis.
    # The full feature blocks are resident across the column sweep (index map
    # constant in j => no re-DMA); only the (N, tile_n) score/attention slabs
    # and the (C, tile_n) output live per step, which keeps realistic feature
    # maps inside v7x's 64 MiB VMEM (shrink tile_n further for very large N).
    out = pl.pallas_call(
        functools.partial(_kca_kernel, w=w, tile_n=tile_n),
        out_shape=jax.ShapeDtypeStruct((b, c, n), jnp.float32),
        grid_spec=pltpu.PrefetchScalarGridSpec(
            num_scalar_prefetch=0,
            grid=(b, num_tiles),
            in_specs=[
                pl.BlockSpec((1, c, n), lambda i, j: (i, 0, 0)),   # resident x
                pl.BlockSpec((1, n, c), lambda i, j: (i, 0, 0)),   # resident x^T
            ],
            out_specs=pl.BlockSpec((1, c, tile_n), lambda i, j: (i, 0, j)),
            scratch_shapes=[pltpu.VMEM((c, n), jnp.float32)],      # boxsum(x)
        ),
        compiler_params=pltpu.CompilerParams(
            dimension_semantics=("parallel", "parallel"),
            vmem_limit_bytes=64 * 1024 * 1024),
    )(x, xt)
    return out.reshape(b, c, h, w)


def _reference(foreground):
    """Pure-JAX transcription of the PyTorch forward (first call).

    Matmuls at Precision.HIGHEST so the gold standard is true f32 on TPU.
    """
    bz, nc, h, w = foreground.shape
    hp = jax.lax.Precision.HIGHEST
    outs = []
    for i in range(bz):
        x = foreground[i].reshape(nc, h * w)                  # (C, N)
        k = x.T + 1e-7                                        # (N, C) kernels
        norm = jnp.sqrt(jnp.sum(k * k, axis=1, keepdims=True))
        kn = k / norm
        # F.conv2d(feature, 1x1 kernels, padding=1): zero-pad spatially
        conv = jnp.matmul(kn, x, precision=hp).reshape(h * w, h, w)
        conv = jnp.pad(conv, ((0, 0), (1, 1), (1, 1)))        # (N, h+2, w+2)
        # F.avg_pool2d(., 3, 1, padding=1) * 9 == zero-padded 3x3 box sum
        cp = jnp.pad(conv, ((0, 0), (1, 1), (1, 1)))
        s = sum(cp[:, dy:dy + h + 2, dx:dx + w + 2]
                for dy in range(3) for dx in range(3))
        att = jax.nn.softmax(s, axis=0)
        # F.conv_transpose2d(att, 1x1 kernels, padding=1): crop the border
        att = att[:, 1:1 + h, 1:1 + w].reshape(h * w, h * w)
        outs.append(jnp.matmul(kn.T, att, precision=hp).reshape(nc, h, w))
    return jnp.stack(outs, axis=0)


if __name__ == "__main__":
    key = jax.random.PRNGKey(0)
    kf, km = jax.random.split(key)
    B, C, H, W = 2, 4, 16, 16
    foreground = jax.random.normal(kf, (B, C, H, W), dtype=jnp.float32)
    masks = (jax.random.uniform(km, (B, 1, H, W)) > 0.5).astype(jnp.float32)
    ratio = jnp.ones((1,), dtype=jnp.float32)   # nn.Parameter(torch.ones(1))

    # tile_n=128 exercises the 2-tile column grid at this small size.
    out = knowledge_consistent_attention(foreground, masks, ratio, tile_n=128)
    out = jax.block_until_ready(out)

    ref = _reference(foreground)
    assert out.shape == (B, C, H, W)
    err = float(jnp.max(jnp.abs(out - ref)))
    if err > 1e-3:
        raise AssertionError(f"kernel/reference mismatch: max abs err = {err}")
    print("KERNEL_OK")
</pallas_src>

<mosaic_0001>
module attributes {stable_mosaic.version = 11 : i64} {
  func.func @_kca_kernel(%arg0: i32, %arg1: i32, %arg2: memref<1x4x256xf32, #tpu.memory_space<vmem>>, %arg3: memref<1x256x4xf32, #tpu.memory_space<vmem>>, %arg4: memref<1x4x128xf32, #tpu.memory_space<vmem>>, %arg5: memref<4x256xf32, #tpu.memory_space<vmem>>) attributes {dimension_semantics = [#tpu.dimension_semantics<parallel>, #tpu.dimension_semantics<parallel>], iteration_bounds = array<i64: 2, 2>, scalar_prefetch = 0 : i64, scratch_operands = 1 : i64, tpu.core_type = #tpu.core_type<tc>, window_params = [{transform_indices = @transform_0, window_bounds = array<i64: 1, 4, 256>}, {transform_indices = @transform_1, window_bounds = array<i64: 1, 256, 4>}, {transform_indices = @transform_2, window_bounds = array<i64: 1, 4, 128>}]} {
    %c0 = arith.constant 0 : index
    %c0_0 = arith.constant 0 : index
    %c0_1 = arith.constant 0 : index
    %0 = vector.load %arg2[%c0, %c0_0, %c0_1] : memref<1x4x256xf32, #tpu.memory_space<vmem>>, vector<1x4x256xf32>
    %1 = vector.shape_cast %0 : vector<1x4x256xf32> to vector<4x256xf32>
    %c0_2 = arith.constant 0 : index
    %c0_3 = arith.constant 0 : index
    %c0_4 = arith.constant 0 : index
    %2 = vector.load %arg3[%c0_2, %c0_3, %c0_4] : memref<1x256x4xf32, #tpu.memory_space<vmem>>, vector<1x256x4xf32>
    %3 = vector.shape_cast %2 : vector<1x256x4xf32> to vector<256x4xf32>
    %cst = arith.constant 1.000000e-07 : f32
    %4 = vector.broadcast %cst : f32 to vector<4x256xf32>
    %5 = arith.addf %1, %4 : vector<4x256xf32>
    %cst_5 = arith.constant 1.000000e-07 : f32
    %6 = vector.broadcast %cst_5 : f32 to vector<256x4xf32>
    %7 = arith.addf %3, %6 : vector<256x4xf32>
    %8 = arith.mulf %5, %5 : vector<4x256xf32>
    %cst_6 = arith.constant dense<0.000000e+00> : vector<256xf32>
    %9 = vector.multi_reduction <add>, %8, %cst_6 [0] : vector<4x256xf32> to vector<256xf32>
    %10 = vector.shape_cast %9 : vector<256xf32> to vector<1x256xf32>
    %11 = math.rsqrt %10 : vector<1x256xf32>
    %12 = vector.broadcast %11 : vector<1x256xf32> to vector<4x256xf32>
    %13 = arith.mulf %5, %12 : vector<4x256xf32>
    %14 = arith.mulf %7, %7 : vector<256x4xf32>
    %cst_7 = arith.constant dense<0.000000e+00> : vector<256xf32>
    %15 = vector.multi_reduction <add>, %14, %cst_7 [1] : vector<256x4xf32> to vector<256xf32>
    %16 = vector.shape_cast %15 : vector<256xf32> to vector<256x1xf32>
    %17 = math.rsqrt %16 : vector<256x1xf32>
    %18 = vector.broadcast %17 : vector<256x1xf32> to vector<256x4xf32>
    %19 = arith.mulf %7, %18 : vector<256x4xf32>
    %20 = tpu.iota {dimensions = array<i32: 1>} : vector<1x256xi32>
    %c16_i32 = arith.constant 16 : i32
    %c0_i32 = arith.constant 0 : i32
    %21 = arith.cmpi eq, %c16_i32, %c0_i32 : i32
    %c1_i32 = arith.constant 1 : i32
    %22 = arith.select %21, %c1_i32, %c16_i32 : i32
    %23 = vector.broadcast %22 : i32 to vector<1x256xi32>
    %24 = arith.remsi %20, %23 : vector<1x256xi32>
    %c0_i32_8 = arith.constant 0 : i32
    %25 = vector.broadcast %c0_i32_8 : i32 to vector<1x256xi32>
    %26 = arith.cmpi ne, %24, %25 : vector<1x256xi32>
    %c0_i32_9 = arith.constant 0 : i32
    %27 = vector.broadcast %c0_i32_9 : i32 to vector<1x256xi32>
    %28 = arith.cmpi slt, %24, %27 : vector<1x256xi32>
    %c0_i32_10 = arith.constant 0 : i32
    %29 = arith.cmpi slt, %22, %c0_i32_10 : i32
    %30 = vector.broadcast %29 : i1 to vector<1x256xi1>
    %31 = vector.broadcast %30 : vector<1x256xi1> to vector<1x256xi1>
    %32 = arith.xori %28, %31 : vector<1x256xi1>
    %33 = arith.andi %32, %26 : vector<1x256xi1>
    %34 = vector.broadcast %22 : i32 to vector<1x256xi32>
    %35 = arith.addi %24, %34 : vector<1x256xi32>
    %36 = arith.select %33, %35, %24 : vector<1x256xi1>, vector<1x256xi32>
    %c0_i32_11 = arith.constant 0 : i32
    %37 = vector.broadcast %c0_i32_11 : i32 to vector<1x256xi32>
    %38 = arith.cmpi sgt, %36, %37 : vector<1x256xi32>
    %c1_i32_12 = arith.constant 1 : i32
    %39 = tpu.dynamic_rotate %1 by %c1_i32_12 dim 1 : vector<4x256xf32>, i32 -> vector<4x256xf32>
    %cst_13 = arith.constant 0.000000e+00 : f32
    %40 = vector.shape_cast %38 : vector<1x256xi1> to vector<1x256xi1>
    %41 = vector.broadcast %40 : vector<1x256xi1> to vector<4x256xi1>
    %42 = vector.broadcast %cst_13 : f32 to vector<4x256xf32>
    %43 = arith.select %41, %39, %42 : vector<4x256xi1>, vector<4x256xf32>
    %c15_i32 = arith.constant 15 : i32
    %44 = vector.broadcast %c15_i32 : i32 to vector<1x256xi32>
    %45 = arith.cmpi slt, %36, %44 : vector<1x256xi32>
    %c255_i32 = arith.constant 255 : i32
    %46 = tpu.dynamic_rotate %1 by %c255_i32 dim 1 : vector<4x256xf32>, i32 -> vector<4x256xf32>
    %cst_14 = arith.constant 0.000000e+00 : f32
    %47 = vector.shape_cast %45 : vector<1x256xi1> to vector<1x256xi1>
    %48 = vector.broadcast %47 : vector<1x256xi1> to vector<4x256xi1>
    %49 = vector.broadcast %cst_14 : f32 to vector<4x256xf32>
    %50 = arith.select %48, %46, %49 : vector<4x256xi1>, vector<4x256xf32>
    %51 = arith.addf %1, %43 : vector<4x256xf32>
    %52 = arith.addf %51, %50 : vector<4x256xf32>
    %c16_i32_15 = arith.constant 16 : i32
    %53 = vector.broadcast %c16_i32_15 : i32 to vector<1x256xi32>
    %54 = arith.cmpi sge, %20, %53 : vector<1x256xi32>
    %c16_i32_16 = arith.constant 16 : i32
    %55 = tpu.dynamic_rotate %52 by %c16_i32_16 dim 1 : vector<4x256xf32>, i32 -> vector<4x256xf32>
    %cst_17 = arith.constant 0.000000e+00 : f32
    %56 = vector.shape_cast %54 : vector<1x256xi1> to vector<1x256xi1>
    %57 = vector.broadcast %56 : vector<1x256xi1> to vector<4x256xi1>
    %58 = vector.broadcast %cst_17 : f32 to vector<4x256xf32>
    %59 = arith.select %57, %55, %58 : vector<4x256xi1>, vector<4x256xf32>
    %c240_i32 = arith.constant 240 : i32
    %60 = vector.broadcast %c240_i32 : i32 to vector<1x256xi32>
    %61 = arith.cmpi slt, %20, %60 : vector<1x256xi32>
    %c240_i32_18 = arith.constant 240 : i32
    %62 = tpu.dynamic_rotate %52 by %c240_i32_18 dim 1 : vector<4x256xf32>, i32 -> vector<4x256xf32>
    %cst_19 = arith.constant 0.000000e+00 : f32
    %63 = vector.shape_cast %61 : vector<1x256xi1> to vector<1x256xi1>
    %64 = vector.broadcast %63 : vector<1x256xi1> to vector<4x256xi1>
    %65 = vector.broadcast %cst_19 : f32 to vector<4x256xf32>
    %66 = arith.select %64, %62, %65 : vector<4x256xi1>, vector<4x256xf32>
    %67 = arith.addf %52, %59 : vector<4x256xf32>
    %68 = arith.addf %67, %66 : vector<4x256xf32>
    %c0_20 = arith.constant 0 : index
    %c0_21 = arith.constant 0 : index
    %69 = vector.load %arg5[%c0_20, %c0_21] : memref<4x256xf32, #tpu.memory_space<vmem>>, vector<4x256xf32>
    tpu.vector_store %arg5[%c0_20, %c0_21], %68 {strides = array<i32>} : memref<4x256xf32, #tpu.memory_space<vmem>>, vector<4x256xf32>,
    %c128_i32 = arith.constant 128 : i32
    %70 = arith.muli %arg1, %c128_i32 : i32
    %71 = tpu.assume_multiple %70, 128 : i32
    %c0_22 = arith.constant 0 : index
    %72 = arith.index_cast %71 : i32 to index
    %73 = vector.load %arg5[%c0_22, %72] : memref<4x256xf32, #tpu.memory_space<vmem>>, vector<4x128xf32>
    %cst_23 = arith.constant dense<0.000000e+00> : vector<256x128xf32>
    %74 = tpu.matmul %19, %73, %cst_23 {dimension_numbers = #tpu.dot_dimension_numbers<[1], [0], [0], [1], [0, 0, 1, 1], [], []>} : vector<256x4xf32>, vector<4x128xf32>, vector<256x128xf32> -> vector<256x128xf32>
    %cst_24 = arith.constant dense<0xFF800000> : vector<128xf32>
    %75 = vector.multi_reduction <maximumf>, %74, %cst_24 [0] : vector<256x128xf32> to vector<128xf32>
    %76 = vector.shape_cast %75 : vector<128xf32> to vector<1x128xf32>
    %77 = vector.broadcast %76 : vector<1x128xf32> to vector<256x128xf32>
    %78 = arith.subf %74, %77 : vector<256x128xf32>
    %79 = math.exp %78 : vector<256x128xf32>
    %cst_25 = arith.constant dense<0.000000e+00> : vector<128xf32>
    %80 = vector.multi_reduction <add>, %79, %cst_25 [0] : vector<256x128xf32> to vector<128xf32>
    %81 = vector.shape_cast %80 : vector<128xf32> to vector<1x128xf32>
    %cst_26 = arith.constant 1.000000e+00 : f32
    %82 = vector.broadcast %cst_26 : f32 to vector<1x128xf32>
    %83 = arith.divf %82, %81 : vector<1x128xf32>
    %cst_27 = arith.constant dense<0.000000e+00> : vector<4x128xf32>
    %84 = tpu.matmul %13, %79, %cst_27 {dimension_numbers = #tpu.dot_dimension_numbers<[1], [0], [0], [1], [0, 0, 1, 1], [], []>} : vector<4x256xf32>, vector<256x128xf32>, vector<4x128xf32> -> vector<4x128xf32>
    %85 = vector.broadcast %83 : vector<1x128xf32> to vector<4x128xf32>
    %86 = arith.mulf %84, %85 : vector<4x128xf32>
    %c0_28 = arith.constant 0 : index
    %c0_29 = arith.constant 0 : index
    %c0_30 = arith.constant 0 : index
    %87 = vector.load %arg4[%c0_28, %c0_29, %c0_30] : memref<1x4x128xf32, #tpu.memory_space<vmem>>, vector<1x4x128xf32>
    %88 = vector.shape_cast %87 : vector<1x4x128xf32> to vector<4x128xf32>
    %89 = vector.shape_cast %86 : vector<4x128xf32> to vector<1x4x128xf32>
    tpu.vector_store %arg4[%c0_28, %c0_29, %c0_30], %89 {strides = array<i32>} : memref<1x4x128xf32, #tpu.memory_space<vmem>>, vector<1x4x128xf32>,
    return
  }
  func.func @transform_0(%arg0: i32, %arg1: i32) -> (i32, i32, i32) {
    %c0_i32 = arith.constant 0 : i32
    %c0_i32_0 = arith.constant 0 : i32
    %c0_i32_1 = arith.constant 0 : i32
    return %arg0, %c0_i32, %c0_i32_0 : i32, i32, i32
  }
  func.func @transform_1(%arg0: i32, %arg1: i32) -> (i32, i32, i32) {
    %c0_i32 = arith.constant 0 : i32
    %c0_i32_0 = arith.constant 0 : i32
    %c0_i32_1 = arith.constant 0 : i32
    return %arg0, %c0_i32, %c0_i32_0 : i32, i32, i32
  }
  func.func @transform_2(%arg0: i32, %arg1: i32) -> (i32, i32, i32) {
    %c0_i32 = arith.constant 0 : i32
    %c0_i32_0 = arith.constant 0 : i32
    return %arg0, %c0_i32, %arg1 : i32, i32, i32
  }
}

</mosaic_0001>

<llo_original>
// kernel: tpu_custom_call.1
$region0: #{tpu_custom_call.1}
  #allocation0 [shape = 'u32[]', space=smem, size = 0x4, offset = 0x4, fixed_abs, tag = 'smem constant byte address 0x4 - core index']
  #allocation1 [shape = 'u32[144,128]{1,0:T(1,128)}', space=vmem, size = 0x12000, scoped, tag = 'internal scratch']
  #allocation2 [shape = 'f32[4,256]{1,0:T(4,128)}', space=vmem, size = 0x1000, scoped, tag = 'scratch operand']
  %s0 = inlined_call_operand.vmem [shape: f32[2,4,256], index: 0, kind: input, shape index: {}]
  %s1 = inlined_call_operand.vmem [shape: f32[2,256,4], index: 1, kind: input, shape index: {}]
  %s2 = inlined_call_operand.hbm [shape: f32[2,4,256], index: 2, kind: output, shape index: {}]
  %s3 = sld [smem:[#allocation0]]
  $region41: #{tpu_custom_call.1} parent=0
    _
  %s5 = ssub.s32 1, %s3
  %s6 = scalar_select 0, %s5, %s3
  $region1: #{tpu_custom_call.1} parent=0
    #allocation3 [shape = 'u8[4096]{0}', space=vmem, size = 0x1000, scoped, tag = 'output window, operand 0']
    #allocation4 [shape = 's32[2]{0}', space=sflag, size = 0x8, scoped, tag = 'scoped memory for tpu_custom_call.1']
    %7 = vsyncpa [#allocation4], 0
    %s8 = scalar_lea.sflag [#allocation4], 1
    %9 = vsyncpa %s8, 0
    loop: start=0, step=1, limit=6
    $region2: #{tpu_custom_call.1} parent=1 // loop_pre_header
      _
    $region3: #{tpu_custom_call.1} parent=1 // loop_header
      %s11 = sphi 0, %s15
      %p12 = scmp.ge.s32.totalorder %s11, 6
      %s18 = sphi 0, %s30
      %s19 = sphi 0, %s26
      %s20 = sphi 0, %s18
      %s21 = sphi 0, %s19
      %s22 = sphi 0, %s20
      %s23 = sphi 0, %s21
      %s33 = sphi 0, %s35
      %s36 = sphi 0, %s33
      %s37 = sphi 0, %s36
      %s53 = sphi 0, %s37
      %s59 = sphi 0, %s61
      %s62 = sphi 0, %s59
      %s63 = sphi 0, %s62
      %s79 = sphi 0, %s63
      %s87 = sphi 0, %s89
      %s90 = sphi 0, %s87
      %s91 = sphi 0, %s90
      %s107 = sphi 0, %s91
    $region4: #{tpu_custom_call.1} parent=1 // loop_header_branch
      %14 = sbr.rel (%p12) target = $region8
    $region5: #{tpu_custom_call.1} parent=1 // loop_body
      %s16 = ssub.s32 %s11, 1
      %s17 = ssub.s32 %s11, 2
      %s24 = sadd.s32 1, %s19
      %p25 = scmp.ge.s32.totalorder %s24, 2
      %s26 = scalar_select %p25, 0, %s24
      %s27 = sadd.s32 1, %s18
      %s28 = scalar_select %p25, %s27, %s18
      %p29 = scmp.ge.s32.totalorder %s28, 2
      %s30 = scalar_select %p29, 0, %s28
      %s31 = ssub.s32 %s18, %s30
      %p32 = scmp.eq.s32.totalorder %s31, 0
      %s34 = sadd.s32 %s33, 1
      %s35 = scalar_select %p32, %s33, %s34
      %p38 = pneg %p32
      %p39 = scmp.eq.s32.totalorder %s11, 3
      %p40 = por %p38, %p39
      %p41 = scmp.ne.s32.totalorder %s33, %s36
      %p42 = scmp.eq.s32.totalorder %s11, 0
      %p43 = por %p41, %p42
      %p44 = scmp.ne.s32.totalorder %s33, %s36
      %p45 = scmp.eq.s32.totalorder %s16, 3
      %p46 = por %p44, %p45
      %p47 = scmp.ne.s32.totalorder %s36, %s37
      %p48 = scmp.eq.s32.totalorder %s16, 0
      %p49 = por %p47, %p48
      %p50 = scmp.ne.s32.totalorder %s36, %s37
      %p51 = scmp.eq.s32.totalorder %s17, 3
      %p52 = por %p50, %p51
      %p54 = scmp.ne.s32.totalorder %s37, %s53
      %p55 = scmp.eq.s32.totalorder %s17, 0
      %p56 = por %p54, %p55
      %s57 = ssub.s32 %s18, %s30
      %p58 = scmp.eq.s32.totalorder %s57, 0
      %s60 = sadd.s32 %s59, 1
      %s61 = scalar_select %p58, %s59, %s60
      %p64 = pneg %p58
      %p65 = scmp.eq.s32.totalorder %s11, 3
      %p66 = por %p64, %p65
      %p67 = scmp.ne.s32.totalorder %s59, %s62
      %p68 = scmp.eq.s32.totalorder %s11, 0
      %p69 = por %p67, %p68
      %p70 = scmp.ne.s32.totalorder %s59, %s62
      %p71 = scmp.eq.s32.totalorder %s16, 3
      %p72 = por %p70, %p71
      %p73 = scmp.ne.s32.totalorder %s62, %s63
      %p74 = scmp.eq.s32.totalorder %s16, 0
      %p75 = por %p73, %p74
      %p76 = scmp.ne.s32.totalorder %s62, %s63
      %p77 = scmp.eq.s32.totalorder %s17, 3
      %p78 = por %p76, %p77
      %p80 = scmp.ne.s32.totalorder %s63, %s79
      %p81 = scmp.eq.s32.totalorder %s17, 0
      %p82 = por %p80, %p81
      %s83 = ssub.s32 %s18, %s30
      %s84 = ssub.s32 %s19, %s26
      %s85 = sor.u32 %s83, %s84
      %p86 = scmp.eq.s32.totalorder %s85, 0
      %s88 = sadd.s32 %s87, 1
      %s89 = scalar_select %p86, %s87, %s88
      %p92 = pneg %p86
      %p93 = scmp.eq.s32.totalorder %s11, 3
      %p94 = por %p92, %p93
      %p95 = scmp.ne.s32.totalorder %s87, %s90
      %p96 = scmp.eq.s32.totalorder %s11, 0
      %p97 = por %p95, %p96
      %p98 = scmp.ne.s32.totalorder %s87, %s90
      %p99 = scmp.eq.s32.totalorder %s16, 3
      %p100 = por %p98, %p99
      %p101 = scmp.ne.s32.totalorder %s90, %s91
      %p102 = scmp.eq.s32.totalorder %s16, 0
      %p103 = por %p101, %p102
      %p104 = scmp.ne.s32.totalorder %s90, %s91
      %p105 = scmp.eq.s32.totalorder %s17, 3
      %p106 = por %p104, %p105
      %p108 = scmp.ne.s32.totalorder %s91, %s107
      %p109 = scmp.eq.s32.totalorder %s17, 0
      %p110 = por %p108, %p109
      %p111 = scmp.le.s32.totalorder 1, %s11
      %p112 = scmp.lt.s32.totalorder %s11, 5
      %p113 = pnand %p111, %p112
      %p114 = pneg %p113
      // Predicated region
      $region9: #{tpu_custom_call.1} parent=5 // pred_check
        _
      $region10: #{tpu_custom_call.1} parent=5 // pred_check_branch
        %116 = sbr.rel (%p113) target = $region12
      $region11: #{tpu_custom_call.1} parent=5 // pred_region
        %s117 = ssub.s32 %s11, 1
      $region12: #{tpu_custom_call.1} parent=5 // pred_fallthru
        _
      %p118 = scmp.lt.s32.totalorder %s11, 4
      // Predicated region
      $region13: #{tpu_custom_call.1} parent=5 // pred_check
        %p119 = pneg %p118
      $region14: #{tpu_custom_call.1} parent=5 // pred_check_branch
        %121 = sbr.rel (%p119) target = $region16
      $region15: #{tpu_custom_call.1} parent=5 // pred_region
        // Predicated region
        $region17: #{tpu_custom_call.1} parent=15 // pred_check
          %p122 = pneg %p43
        $region18: #{tpu_custom_call.1} parent=15 // pred_check_branch
          %124 = sbr.rel (%p122) target = $region20
        $region19: #{tpu_custom_call.1} parent=15 // pred_region
          %p125 = scmp.lt.s32.totalorder %s18, 1
          %s126 = scalar_select %p125, %s18, 1
          %s127 = smul.addr %s126, 2
          %s128 = smul.addr %s127, 4
          %s129 = scalar_lea.vmem %s0, %s128
        $region20: #{tpu_custom_call.1} parent=15 // pred_fallthru
          _
        // Predicated region
        $region21: #{tpu_custom_call.1} parent=15 // pred_check
          %p130 = pneg %p69
        $region22: #{tpu_custom_call.1} parent=15 // pred_check_branch
          %132 = sbr.rel (%p130) target = $region24
        $region23: #{tpu_custom_call.1} parent=15 // pred_region
          %p133 = scmp.lt.s32.totalorder %s18, 1
          %s134 = scalar_select %p133, %s18, 1
          %s135 = smul.addr %s134, 32
          %s136 = smul.addr %s135, 8
          %s137 = scalar_lea.vmem %s1, %s136
        $region24: #{tpu_custom_call.1} parent=15 // pred_fallthru
          _
      $region16: #{tpu_custom_call.1} parent=5 // pred_fallthru
        _
      %p138 = scmp.le.s32.totalorder 1, %s11
      %p139 = scmp.lt.s32.totalorder %s11, 5
      %p140 = pnand %p138, %p139
      %p141 = pneg %p140
      // Predicated region
      $region25: #{tpu_custom_call.1} parent=5 // pred_check
        _
      $region26: #{tpu_custom_call.1} parent=5 // pred_check_branch
        %143 = sbr.rel (%p140) target = $region28
      $region27: #{tpu_custom_call.1} parent=5 // pred_region
        %s144 = ssub.s32 %s11, 1
        %p145 = scmp.lt.s32.totalorder %s20, 1
        %s146 = scalar_select %p145, %s20, 1
        %s147 = smul.addr %s146, 2
        %s148 = smul.addr %s147, 4
        %s149 = scalar_lea.vmem %s0, %s148
        %p150 = pneg %p49
        %p151 = pneg %p46
        %p152 = scmp.lt.s32.totalorder %s20, 1
        %s153 = scalar_select %p152, %s20, 1
        %s154 = smul.addr %s153, 32
        %s155 = smul.addr %s154, 8
        %s156 = scalar_lea.vmem %s1, %s155
        %p157 = pneg %p75
        %p158 = pneg %p72
        %p159 = pneg %p103
        %p160 = pneg %p100
        %s161 = sand.u32 %s90, 1
        %s162 = scalar_lea.sflag [#allocation4], %s161
        %s163 = sand.u32 %s90, 1
        %s164 = smul.addr %s163, 4
        %s165 = scalar_lea.vmem [#allocation3], %s164
        %p166 = scmp.lt.s32.totalorder %s20, 1
        %s167 = scalar_select %p166, %s20, 1
        %s168 = smul.addr %s167, 2
        %s169 = smul.addr %s168, 4
        %s170 = scalar_lea.vmem %s0, %s169
        %p171 = scmp.lt.s32.totalorder %s20, 1
        %s172 = scalar_select %p171, %s20, 1
        %s173 = smul.addr %s172, 32
        %s174 = smul.addr %s173, 8
        %s175 = scalar_lea.vmem %s1, %s174
        %v176 = vld [vmem:[%s170] sm:$0xff]
        %v177 = vld [vmem:[%s175] sm:$0xff]
        %v178 = vld [vmem:[%s175 + $0x8] sm:$0xff]
        %v179 = vld [vmem:[%s175 + $0x10] sm:$0xff]
        %v180 = vld [vmem:[%s175 + $0x18] sm:$0xff]
        %v181 = vld [vmem:[%s175 + $0x20] sm:$0xff]
        %v182 = vld [vmem:[%s175 + $0x28] sm:$0xff]
        %v183 = vld [vmem:[%s175 + $0x30] sm:$0xff]
        %v184 = vld [vmem:[%s175 + $0x38] sm:$0xff]
        %v185 = vld [vmem:[%s175 + $0x40] sm:$0xff]
        %v186 = vld [vmem:[%s175 + $0x48] sm:$0xff]
        %v187 = vld [vmem:[%s175 + $0x50] sm:$0xff]
        %v188 = vld [vmem:[%s175 + $0x58] sm:$0xff]
        %v189 = vld [vmem:[%s175 + $0x60] sm:$0xff]
        %v190 = vld [vmem:[%s175 + $0x68] sm:$0xff]
        %v191 = vld [vmem:[%s175 + $0x70] sm:$0xff]
        %v192 = vld [vmem:[%s175 + $0x78] sm:$0xff]
        %v193 = vld [vmem:[%s175 + $0x80] sm:$0xff]
        %v194 = vld [vmem:[%s175 + $0x88] sm:$0xff]
        %v195 = vld [vmem:[%s175 + $0x90] sm:$0xff]
        %v196 = vld [vmem:[%s175 + $0x98] sm:$0xff]
        %v197 = vld [vmem:[%s175 + $0xa0] sm:$0xff]
        %v198 = vld [vmem:[%s175 + $0xa8] sm:$0xff]
        %v199 = vld [vmem:[%s175 + $0xb0] sm:$0xff]
        %v200 = vld [vmem:[%s175 + $0xb8] sm:$0xff]
        %v201 = vld [vmem:[%s175 + $0xc0] sm:$0xff]
        %v202 = vld [vmem:[%s175 + $0xc8] sm:$0xff]
        %v203 = vld [vmem:[%s175 + $0xd0] sm:$0xff]
        %v204 = vld [vmem:[%s175 + $0xd8] sm:$0xff]
        %v205 = vld [vmem:[%s175 + $0xe0] sm:$0xff]
        %v206 = vld [vmem:[%s175 + $0xe8] sm:$0xff]
        %v207 = vld [vmem:[%s175 + $0xf0] sm:$0xff]
        %v208 = vld [vmem:[%s175 + $0xf8] sm:$0xff]
        %v209 = vadd.f32 %v176, 1e-07
        %v210 = vadd.f32 %v177, 1e-07
        %v211 = vadd.f32 %v178, 1e-07
        %v212 = vadd.f32 %v179, 1e-07
        %v213 = vadd.f32 %v180, 1e-07
        %v214 = vadd.f32 %v181, 1e-07
        %v215 = vadd.f32 %v182, 1e-07
        %v216 = vadd.f32 %v183, 1e-07
        %v217 = vadd.f32 %v184, 1e-07
        %v218 = vadd.f32 %v185, 1e-07
        %v219 = vadd.f32 %v186, 1e-07
        %v220 = vadd.f32 %v187, 1e-07
        %v221 = vadd.f32 %v188, 1e-07
        %v222 = vadd.f32 %v189, 1e-07
        %v223 = vadd.f32 %v190, 1e-07
        %v224 = vadd.f32 %v191, 1e-07
        %v225 = vadd.f32 %v192, 1e-07
        %v226 = vadd.f32 %v193, 1e-07
        %v227 = vadd.f32 %v194, 1e-07
        %v228 = vadd.f32 %v195, 1e-07
        %v229 = vadd.f32 %v196, 1e-07
        %v230 = vadd.f32 %v197, 1e-07
        %v231 = vadd.f32 %v198, 1e-07
        %v232 = vadd.f32 %v199, 1e-07
        %v233 = vadd.f32 %v200, 1e-07
        %v234 = vadd.f32 %v201, 1e-07
        %v235 = vadd.f32 %v202, 1e-07
        %v236 = vadd.f32 %v203, 1e-07
        %v237 = vadd.f32 %v204, 1e-07
        %v238 = vadd.f32 %v205, 1e-07
        %v239 = vadd.f32 %v206, 1e-07
        %v240 = vadd.f32 %v207, 1e-07
        %v241 = vadd.f32 %v208, 1e-07
        %v242 = vmul.f32 %v209, %v209
        %v244 = vcombine.high %v242, %v242
        %vm246 = vcmask 1043456
        %v247 = vsel %vm246, %v242, 0.0
        %v248 = vrot.slane %v247, 4
        %v249 = vadd.f32 %v247, %v248
        %v250 = vrot.slane %v249, 2
        %v251 = vadd.f32 %v249, %v250
        %v252 = vrot.slane %v251, 1
        %v253 = vadd.f32 %v251, %v252
        %v254 = vsel %vm246, %v244, 0.0
        %v255 = vrot.slane %v254, 4
        %v256 = vadd.f32 %v254, %v255
        %v257 = vrot.slane %v256, 2
        %v258 = vadd.f32 %v256, %v257
        %v259 = vrot.slane %v258, 1
        %v260 = vadd.f32 %v258, %v259
        %v261 = vrsqrt.pop %v253
        %v262 = vrsqrt.pop %v260
        %v265 = vcombine.low %v261, %v262
        %v267 = vmul.f32 %v209, %v265
        %v268 = vmul.f32 %v210, %v210
        %v269 = vmul.f32 %v211, %v211
        %v270 = vmul.f32 %v212, %v212
        %v271 = vmul.f32 %v213, %v213
        %v272 = vmul.f32 %v214, %v214
        %v273 = vmul.f32 %v215, %v215
        %v274 = vmul.f32 %v216, %v216
        %v275 = vmul.f32 %v217, %v217
        %v276 = vmul.f32 %v218, %v218
        %v277 = vmul.f32 %v219, %v219
        %v278 = vmul.f32 %v220, %v220
        %v279 = vmul.f32 %v221, %v221
        %v280 = vmul.f32 %v222, %v222
        %v281 = vmul.f32 %v223, %v223
        %v282 = vmul.f32 %v224, %v224
        %v283 = vmul.f32 %v225, %v225
        %v284 = vmul.f32 %v226, %v226
        %v285 = vmul.f32 %v227, %v227
        %v286 = vmul.f32 %v228, %v228
        %v287 = vmul.f32 %v229, %v229
        %v288 = vmul.f32 %v230, %v230
        %v289 = vmul.f32 %v231, %v231
        %v290 = vmul.f32 %v232, %v232
        %v291 = vmul.f32 %v233, %v233
        %v292 = vmul.f32 %v234, %v234
        %v293 = vmul.f32 %v235, %v235
        %v294 = vmul.f32 %v236, %v236
        %v295 = vmul.f32 %v237, %v237
        %v296 = vmul.f32 %v238, %v238
        %v297 = vmul.f32 %v239, %v239
        %v298 = vmul.f32 %v240, %v240
        %v299 = vmul.f32 %v241, %v241
        %vm300 = vcmask 31744
        %v301 = vsel %vm300, %v268, 0.0
        %302 = vadd.xlane.f32.xlu0 %v301
        %v303 = vpop.xlane.xlu0 %302
        %v304 = vsel %vm300, %v269, 0.0
        %305 = vadd.xlane.f32.xlu0 %v304
        %v306 = vpop.xlane.xlu0 %305
        %v307 = vsel %vm300, %v270, 0.0
        %308 = vadd.xlane.f32.xlu0 %v307
        %v309 = vpop.xlane.xlu0 %308
        %v310 = vsel %vm300, %v271, 0.0
        %311 = vadd.xlane.f32.xlu0 %v310
        %v312 = vpop.xlane.xlu0 %311
        %v313 = vsel %vm300, %v272, 0.0
        %314 = vadd.xlane.f32.xlu0 %v313
        %v315 = vpop.xlane.xlu0 %314
        %v316 = vsel %vm300, %v273, 0.0
        %317 = vadd.xlane.f32.xlu0 %v316
        %v318 = vpop.xlane.xlu0 %317
        %v319 = vsel %vm300, %v274, 0.0
        %320 = vadd.xlane.f32.xlu0 %v319
        %v321 = vpop.xlane.xlu0 %320
        %v322 = vsel %vm300, %v275, 0.0
        %323 = vadd.xlane.f32.xlu0 %v322
        %v324 = vpop.xlane.xlu0 %323
        %v325 = vsel %vm300, %v276, 0.0
        %326 = vadd.xlane.f32.xlu0 %v325
        %v327 = vpop.xlane.xlu0 %326
        %v328 = vsel %vm300, %v277, 0.0
        %329 = vadd.xlane.f32.xlu0 %v328
        %v330 = vpop.xlane.xlu0 %329
        %v331 = vsel %vm300, %v278, 0.0
        %332 = vadd.xlane.f32.xlu0 %v331
        %v333 = vpop.xlane.xlu0 %332
        %v334 = vsel %vm300, %v279, 0.0
        %335 = vadd.xlane.f32.xlu0 %v334
        %v336 = vpop.xlane.xlu0 %335
        %v337 = vsel %vm300, %v280, 0.0
        %338 = vadd.xlane.f32.xlu0 %v337
        %v339 = vpop.xlane.xlu0 %338
        %v340 = vsel %vm300, %v281, 0.0
        %341 = vadd.xlane.f32.xlu0 %v340
        %v342 = vpop.xlane.xlu0 %341
        %v343 = vsel %vm300, %v282, 0.0
        %344 = vadd.xlane.f32.xlu0 %v343
        %v345 = vpop.xlane.xlu0 %344
        %v346 = vsel %vm300, %v283, 0.0
        %347 = vadd.xlane.f32.xlu0 %v346
        %v348 = vpop.xlane.xlu0 %347
        %v349 = vsel %vm300, %v284, 0.0
        %350 = vadd.xlane.f32.xlu0 %v349
        %v351 = vpop.xlane.xlu0 %350
        %v352 = vsel %vm300, %v285, 0.0
        %353 = vadd.xlane.f32.xlu0 %v352
        %v354 = vpop.xlane.xlu0 %353
        %v355 = vsel %vm300, %v286, 0.0
        %356 = vadd.xlane.f32.xlu0 %v355
        %v357 = vpop.xlane.xlu0 %356
        %v358 = vsel %vm300, %v287, 0.0
        %359 = vadd.xlane.f32.xlu0 %v358
        %v360 = vpop.xlane.xlu0 %359
        %v361 = vsel %vm300, %v288, 0.0
        %362 = vadd.xlane.f32.xlu0 %v361
        %v363 = vpop.xlane.xlu0 %362
        %v364 = vsel %vm300, %v289, 0.0
        %365 = vadd.xlane.f32.xlu0 %v364
        %v366 = vpop.xlane.xlu0 %365
        %v367 = vsel %vm300, %v290, 0.0
        %368 = vadd.xlane.f32.xlu0 %v367
        %v369 = vpop.xlane.xlu0 %368
        %v370 = vsel %vm300, %v291, 0.0
        %371 = vadd.xlane.f32.xlu0 %v370
        %v372 = vpop.xlane.xlu0 %371
        %v373 = vsel %vm300, %v292, 0.0
        %374 = vadd.xlane.f32.xlu0 %v373
        %v375 = vpop.xlane.xlu0 %374
        %v376 = vsel %vm300, %v293, 0.0
        %377 = vadd.xlane.f32.xlu0 %v376
        %v378 = vpop.xlane.xlu0 %377
        %v379 = vsel %vm300, %v294, 0.0
        %380 = vadd.xlane.f32.xlu0 %v379
        %v381 = vpop.xlane.xlu0 %380
        %v382 = vsel %vm300, %v295, 0.0
        %383 = vadd.xlane.f32.xlu0 %v382
        %v384 = vpop.xlane.xlu0 %383
        %v385 = vsel %vm300, %v296, 0.0
        %386 = vadd.xlane.f32.xlu0 %v385
        %v387 = vpop.xlane.xlu0 %386
        %v388 = vsel %vm300, %v297, 0.0
        %389 = vadd.xlane.f32.xlu0 %v388
        %v390 = vpop.xlane.xlu0 %389
        %v391 = vsel %vm300, %v298, 0.0
        %392 = vadd.xlane.f32.xlu0 %v391
        %v393 = vpop.xlane.xlu0 %392
        %v394 = vsel %vm300, %v299, 0.0
        %395 = vadd.xlane.f32.xlu0 %v394
        %v396 = vpop.xlane.xlu0 %395
        %v397 = vrsqrt.pop %v303
        %v398 = vrsqrt.pop %v306
        %v399 = vrsqrt.pop %v309
        %v400 = vrsqrt.pop %v312
        %v401 = vrsqrt.pop %v315
        %v402 = vrsqrt.pop %v318
        %v403 = vrsqrt.pop %v321
        %v404 = vrsqrt.pop %v324
        %v405 = vrsqrt.pop %v327
        %v406 = vrsqrt.pop %v330
        %v407 = vrsqrt.pop %v333
        %v408 = vrsqrt.pop %v336
        %v409 = vrsqrt.pop %v339
        %v410 = vrsqrt.pop %v342
        %v411 = vrsqrt.pop %v345
        %v412 = vrsqrt.pop %v348
        %v413 = vrsqrt.pop %v351
        %v414 = vrsqrt.pop %v354
        %v415 = vrsqrt.pop %v357
        %v416 = vrsqrt.pop %v360
        %v417 = vrsqrt.pop %v363
        %v418 = vrsqrt.pop %v366
        %v419 = vrsqrt.pop %v369
        %v420 = vrsqrt.pop %v372
        %v421 = vrsqrt.pop %v375
        %v422 = vrsqrt.pop %v378
        %v423 = vrsqrt.pop %v381
        %v424 = vrsqrt.pop %v384
        %v425 = vrsqrt.pop %v387
        %v426 = vrsqrt.pop %v390
        %v427 = vrsqrt.pop %v393
        %v428 = vrsqrt.pop %v396
        %v429 = vmul.f32 %v210, %v397
        %v430 = vmul.f32 %v211, %v398
        %v431 = vmul.f32 %v212, %v399
        %v432 = vmul.f32 %v213, %v400
        %v433 = vmul.f32 %v214, %v401
        %v434 = vmul.f32 %v215, %v402
        %v435 = vmul.f32 %v216, %v403
        %v436 = vmul.f32 %v217, %v404
        %v437 = vmul.f32 %v218, %v405
        %v438 = vmul.f32 %v219, %v406
        %v439 = vmul.f32 %v220, %v407
        %v440 = vmul.f32 %v221, %v408
        %v441 = vmul.f32 %v222, %v409
        %v442 = vmul.f32 %v223, %v410
        %v443 = vmul.f32 %v224, %v411
        %v444 = vmul.f32 %v225, %v412
        %v445 = vmul.f32 %v226, %v413
        %v446 = vmul.f32 %v227, %v414
        %v447 = vmul.f32 %v228, %v415
        %v448 = vmul.f32 %v229, %v416
        %v449 = vmul.f32 %v230, %v417
        %v450 = vmul.f32 %v231, %v418
        %v451 = vmul.f32 %v232, %v419
        %v452 = vmul.f32 %v233, %v420
        %v453 = vmul.f32 %v234, %v421
        %v454 = vmul.f32 %v235, %v422
        %v455 = vmul.f32 %v236, %v423
        %v456 = vmul.f32 %v237, %v424
        %v457 = vmul.f32 %v238, %v425
        %v458 = vmul.f32 %v239, %v426
        %v459 = vmul.f32 %v240, %v427
        %v460 = vmul.f32 %v241, %v428
        %v461 = vlaneseq
        %v462 = vand.u32 %v461, 127
        %v463 = vadd.s32 %v462, 128
        %vm464 = vcmp.lt.s32.totalorder %v462, 0
        %v465 = vsub.s32 0, %v462
        %v466 = vsel %vm464, %v465, %v462
        %v467 = vshrl.u32 %v466, 4
        %v468 = vand.u32 %v466, 15
        %v469 = vsub.s32 0, %v468
        %v470 = vsel %vm464, %v469, %v468
        %vm471 = vcmp.lt.s32.totalorder %v463, 0
        %v472 = vsub.s32 0, %v463
        %v473 = vsel %vm471, %v472, %v463
        %v474 = vshrl.u32 %v473, 4
        %v475 = vand.u32 %v473, 15
        %v476 = vsub.s32 0, %v475
        %v477 = vsel %vm471, %v476, %v475
        %vm478 = vcmp.ne.s32.totalorder %v470, 0
        %vm479 = vcmp.ne.s32.totalorder %v477, 0
        %vm480 = vcmp.lt.s32.totalorder %v470, 0
        %vm481 = vcmp.lt.s32.totalorder %v477, 0
        %vm482 = vmand %vm480, %vm478
        %vm483 = vmand %vm481, %vm479
        %v484 = vadd.s32 %v470, 16
        %v485 = vadd.s32 %v477, 16
        %v486 = vsel %vm482, %v484, %v470
        %v487 = vsel %vm483, %v485, %v477
        %vm488 = vcmp.gt.s32.totalorder %v486, 0
        %vm489 = vcmp.gt.s32.totalorder %v487, 0
        %v491 = vcombine.high %v176, %v176
        %493 = vrot.lane.b32.xlu0 %v176, 1
        %v494 = vpop.permute.xlu0 %493
        %495 = vrot.lane.b32.xlu0 %v491, 1
        %v496 = vpop.permute.xlu0 %495
        %vm497 = vcmp.lt.s32.totalorder %v462, 1
        %v498 = vsel %vm497, %v494, %v496
        %v499 = vsel %vm497, %v496, %v494
        %v500 = vsel %vm488, 1, 0
        %v501 = vsel %vm489, 1, 0
        %vm502 = vcmp.eq.s32.totalorder %v500, 1
        %vm503 = vcmp.eq.s32.totalorder %v501, 1
        %v504 = vsel %vm502, %v499, 0.0
        %v505 = vsel %vm503, %v498, 0.0
        %vm506 = vcmp.lt.s32.totalorder %v486, 15
        %vm507 = vcmp.lt.s32.totalorder %v487, 15
        %508 = vrot.lane.b32.xlu0 %v176, 127
        %v509 = vpop.permute.xlu0 %508
        %510 = vrot.lane.b32.xlu0 %v491, 127
        %v511 = vpop.permute.xlu0 %510
        %vm512 = vcmp.lt.s32.totalorder %v462, 127
        %v513 = vsel %vm512, %v509, %v511
        %v514 = vsel %vm512, %v511, %v509
        %v515 = vsel %vm506, 1, 0
        %v516 = vsel %vm507, 1, 0
        %vm517 = vcmp.eq.s32.totalorder %v515, 1
        %vm518 = vcmp.eq.s32.totalorder %v516, 1
        %v519 = vsel %vm517, %v513, 0.0
        %v520 = vsel %vm518, %v514, 0.0
        %v523 = vcombine.low %v504, %v505
        %v525 = vadd.f32 %v176, %v523
        %v528 = vcombine.low %v519, %v520
        %v530 = vadd.f32 %v525, %v528
        %vm531 = vcmp.ge.s32.totalorder %v462, 16
        %vm532 = vcmp.ge.s32.totalorder %v463, 16
        %v534 = vcombine.high %v530, %v530
        %536 = vrot.lane.b32.xlu0 %v530, 16
        %v537 = vpop.permute.xlu0 %536
        %538 = vrot.lane.b32.xlu0 %v534, 16
        %v539 = vpop.permute.xlu0 %538
        %vm540 = vcmp.lt.s32.totalorder %v462, 16
        %v541 = vsel %vm540, %v537, %v539
        %v542 = vsel %vm540, %v539, %v537
        %v543 = vsel %vm531, 1, 0
        %v544 = vsel %vm532, 1, 0
        %vm545 = vcmp.eq.s32.totalorder %v543, 1
        %vm546 = vcmp.eq.s32.totalorder %v544, 1
        %v547 = vsel %vm545, %v542, 0.0
        %v548 = vsel %vm546, %v541, 0.0
        %vm549 = vcmp.lt.s32.totalorder %v462, 240
        %vm550 = vcmp.lt.s32.totalorder %v463, 240
        %551 = vrot.lane.b32.xlu0 %v530, 112
        %v552 = vpop.permute.xlu0 %551
        %553 = vrot.lane.b32.xlu0 %v534, 112
        %v554 = vpop.permute.xlu0 %553
        %vm555 = vcmp.lt.s32.totalorder %v462, 112
        %v556 = vsel %vm555, %v552, %v554
        %v557 = vsel %vm555, %v554, %v552
        %v558 = vsel %vm549, 1, 0
        %v559 = vsel %vm550, 1, 0
        %vm560 = vcmp.eq.s32.totalorder %v558, 1
        %vm561 = vcmp.eq.s32.totalorder %v559, 1
        %v562 = vsel %vm560, %v556, 0.0
        %v563 = vsel %vm561, %v557, 0.0
        %v566 = vcombine.low %v547, %v548
        %v568 = vadd.f32 %v530, %v566
        %v571 = vcombine.low %v562, %v563
        %v573 = vadd.f32 %v568, %v571
        %574 = vst [vmem:[#allocation2] sm:$0xff] %v573
        %s575 = smul.u32 %s21, 128
        %s576 = sshra.s32 %s575, 7
        %s577 = sand.u32 %s575, 127
        %s578 = smul.addr %s576, 4
        %s579 = scalar_lea.vmem [#allocation2], %s578
        %v580 = vld [vmem:[%s579] sm:$0xf]
        %v582 = vsel %vm300, %v429, 0
        %v585 = vsel %vm300, %v430, 0
        %v588 = vsel %vm300, %v431, 0
        %v591 = vsel %vm300, %v432, 0
        %v594 = vsel %vm300, %v433, 0
        %v597 = vsel %vm300, %v434, 0
        %v600 = vsel %vm300, %v435, 0
        %v603 = vsel %vm300, %v436, 0
        %v606 = vsel %vm300, %v437, 0
        %v609 = vsel %vm300, %v438, 0
        %v612 = vsel %vm300, %v439, 0
        %v615 = vsel %vm300, %v440, 0
        %v618 = vsel %vm300, %v441, 0
        %v621 = vsel %vm300, %v442, 0
        %v624 = vsel %vm300, %v443, 0
        %v627 = vsel %vm300, %v444, 0
        %v630 = vsel %vm300, %v445, 0
        %v633 = vsel %vm300, %v446, 0
        %v636 = vsel %vm300, %v447, 0
        %v639 = vsel %vm300, %v448, 0
        %v642 = vsel %vm300, %v449, 0
        %v645 = vsel %vm300, %v450, 0
        %v648 = vsel %vm300, %v451, 0
        %v651 = vsel %vm300, %v452, 0
        %v654 = vsel %vm300, %v453, 0
        %v657 = vsel %vm300, %v454, 0
        %v660 = vsel %vm300, %v455, 0
        %v663 = vsel %vm300, %v456, 0
        %v666 = vsel %vm300, %v457, 0
        %v669 = vsel %vm300, %v458, 0
        %v672 = vsel %vm300, %v459, 0
        %v675 = vsel %vm300, %v460, 0
        %v678 = vsel %vm246, %v580, 0
        %680 = vmatprep.subr.mxu0 0.0
        %681 = vmatpush1.msra.mxu0 0.0
        %682 = vmatprep.subr.mxu0 0.0
        %683 = vmatpush1.msra.mxu0 0.0
        %684 = vmatprep.subr.mxu0 0.0
        %685 = vmatpush1.msra.mxu0 0.0
        %686 = vmatprep.subr.mxu0 0.0
        %687 = vmatpush1.msra.mxu0 0.0
        %688 = vmatprep.subr.mxu0 0.0
        %689 = vmatpush1.msra.mxu0 0.0
        %690 = vmatprep.subr.mxu0 0.0
        %691 = vmatpush1.msra.mxu0 0.0
        %692 = vmatprep.subr.mxu0 0.0
        %693 = vmatpush1.msra.mxu0 0.0
        %694 = vmatprep.subr.mxu0 0.0
        %695 = vmatpush1.msra.mxu0 0.0
        %696 = vmatprep.subr.mxu0 0.0
        %697 = vmatpush1.msra.mxu0 0.0
        %698 = vmatprep.subr.mxu0 0.0
        %699 = vmatpush1.msra.mxu0 0.0
        %700 = vmatprep.subr.mxu0 0.0
        %701 = vmatpush1.msra.mxu0 0.0
        %702 = vmatprep.subr.mxu0 0.0
        %703 = vmatpush1.msra.mxu0 0.0
        %704 = vmatprep.subr.mxu0 0.0
        %705 = vmatpush1.msra.mxu0 0.0
        %706 = vmatprep.subr.mxu0 0.0
        %707 = vmatpush1.msra.mxu0 0.0
        %708 = vmatprep.subr.mxu0 0.0
        %709 = vmatpush1.msra.mxu0 0.0
        %710 = vmatprep.subr.mxu0 0.0
        %711 = vmatpush1.msra.mxu0 %v678
        %712 = vmatprep.subr.mxu0 0.0
        %713 = vmatpush2.msra.mxu0 0.0
        %714 = vmatprep.subr.mxu0 0.0
        %715 = vmatpush2.msra.mxu0 0.0
        %716 = vmatprep.subr.mxu0 0.0
        %717 = vmatpush2.msra.mxu0 0.0
        %718 = vmatprep.subr.mxu0 0.0
        %719 = vmatpush2.msra.mxu0 0.0
        %720 = vmatprep.subr.mxu0 0.0
        %721 = vmatpush2.msra.mxu0 0.0
        %722 = vmatprep.subr.mxu0 0.0
        %723 = vmatpush2.msra.mxu0 0.0
        %724 = vmatprep.subr.mxu0 0.0
        %725 = vmatpush2.msra.mxu0 0.0
        %726 = vmatprep.subr.mxu0 0.0
        %727 = vmatpush2.msra.mxu0 0.0
        %728 = vmatprep.subr.mxu0 0.0
        %729 = vmatpush2.msra.mxu0 0.0
        %730 = vmatprep.subr.mxu0 0.0
        %731 = vmatpush2.msra.mxu0 0.0
        %732 = vmatprep.subr.mxu0 0.0
        %733 = vmatpush2.msra.mxu0 0.0
        %734 = vmatprep.subr.mxu0 0.0
        %735 = vmatpush2.msra.mxu0 0.0
        %736 = vmatprep.subr.mxu0 0.0
        %737 = vmatpush2.msra.mxu0 0.0
        %738 = vmatprep.subr.mxu0 0.0
        %739 = vmatpush2.msra.mxu0 0.0
        %740 = vmatprep.subr.mxu0 0.0
        %741 = vmatpush2.msra.mxu0 0.0
        %742 = vmatprep.subr.mxu0 0.0
        %743 = vmatpush2.msra.mxu0 0.0
        %744 = vmatprep.mubr.f32.mxu0 0.0
        %745 = vmatmul.mubr.f32.gmra.mxu0 %v582
        %v746 = vpop.f32.mrf.mxu0
        %v747 = vadd.f32 0.0, %v746
        %v748 = vpop.f32.mrf.mxu0
        %749 = vmatprep.mubr.f32.mxu0 0.0
        %750 = vmatmul.mubr.f32.gmra.mxu0 %v585
        %v751 = vpop.f32.mrf.mxu0
        %v752 = vadd.f32 0.0, %v751
        %v753 = vpop.f32.mrf.mxu0
        %754 = vmatprep.mubr.f32.mxu0 0.0
        %755 = vmatmul.mubr.f32.gmra.mxu0 %v588
        %v756 = vpop.f32.mrf.mxu0
        %v757 = vadd.f32 0.0, %v756
        %v758 = vpop.f32.mrf.mxu0
        %759 = vmatprep.mubr.f32.mxu0 0.0
        %760 = vmatmul.mubr.f32.gmra.mxu0 %v591
        %v761 = vpop.f32.mrf.mxu0
        %v762 = vadd.f32 0.0, %v761
        %v763 = vpop.f32.mrf.mxu0
        %764 = vmatprep.mubr.f32.mxu0 0.0
        %765 = vmatmul.mubr.f32.gmra.mxu0 %v594
        %v766 = vpop.f32.mrf.mxu0
        %v767 = vadd.f32 0.0, %v766
        %v768 = vpop.f32.mrf.mxu0
        %769 = vmatprep.mubr.f32.mxu0 0.0
        %770 = vmatmul.mubr.f32.gmra.mxu0 %v597
        %v771 = vpop.f32.mrf.mxu0
        %v772 = vadd.f32 0.0, %v771
        %v773 = vpop.f32.mrf.mxu0
        %774 = vmatprep.mubr.f32.mxu0 0.0
        %775 = vmatmul.mubr.f32.gmra.mxu0 %v600
        %v776 = vpop.f32.mrf.mxu0
        %v777 = vadd.f32 0.0, %v776
        %v778 = vpop.f32.mrf.mxu0
        %779 = vmatprep.mubr.f32.mxu0 0.0
        %780 = vmatmul.mubr.f32.gmra.mxu0 %v603
        %v781 = vpop.f32.mrf.mxu0
        %v782 = vadd.f32 0.0, %v781
        %v783 = vpop.f32.mrf.mxu0
        %784 = vmatprep.mubr.f32.mxu0 0.0
        %785 = vmatmul.mubr.f32.gmra.mxu0 %v606
        %v786 = vpop.f32.mrf.mxu0
        %v787 = vadd.f32 0.0, %v786
        %v788 = vpop.f32.mrf.mxu0
        %789 = vmatprep.mubr.f32.mxu0 0.0
        %790 = vmatmul.mubr.f32.gmra.mxu0 %v609
        %v791 = vpop.f32.mrf.mxu0
        %v792 = vadd.f32 0.0, %v791
        %v793 = vpop.f32.mrf.mxu0
        %794 = vmatprep.mubr.f32.mxu0 0.0
        %795 = vmatmul.mubr.f32.gmra.mxu0 %v612
        %v796 = vpop.f32.mrf.mxu0
        %v797 = vadd.f32 0.0, %v796
        %v798 = vpop.f32.mrf.mxu0
        %799 = vmatprep.mubr.f32.mxu0 0.0
        %800 = vmatmul.mubr.f32.gmra.mxu0 %v615
        %v801 = vpop.f32.mrf.mxu0
        %v802 = vadd.f32 0.0, %v801
        %v803 = vpop.f32.mrf.mxu0
        %804 = vmatprep.mubr.f32.mxu0 0.0
        %805 = vmatmul.mubr.f32.gmra.mxu0 %v618
        %v806 = vpop.f32.mrf.mxu0
        %v807 = vadd.f32 0.0, %v806
        %v808 = vpop.f32.mrf.mxu0
        %809 = vmatprep.mubr.f32.mxu0 0.0
        %810 = vmatmul.mubr.f32.gmra.mxu0 %v621
        %v811 = vpop.f32.mrf.mxu0
        %v812 = vadd.f32 0.0, %v811
        %v813 = vpop.f32.mrf.mxu0
        %814 = vmatprep.mubr.f32.mxu0 0.0
        %815 = vmatmul.mubr.f32.gmra.mxu0 %v624
        %v816 = vpop.f32.mrf.mxu0
        %v817 = vadd.f32 0.0, %v816
        %v818 = vpop.f32.mrf.mxu0
        %819 = vmatprep.mubr.f32.mxu0 0.0
        %820 = vmatmul.mubr.f32.gmra.mxu0 %v627
        %v821 = vpop.f32.mrf.mxu0
        %v822 = vadd.f32 0.0, %v821
        %v823 = vpop.f32.mrf.mxu0
        %824 = vmatprep.mubr.f32.mxu0 0.0
        %825 = vmatmul.mubr.f32.gmra.mxu0 %v630
        %v826 = vpop.f32.mrf.mxu0
        %v827 = vadd.f32 0.0, %v826
        %v828 = vpop.f32.mrf.mxu0
        %829 = vmatprep.mubr.f32.mxu0 0.0
        %830 = vmatmul.mubr.f32.gmra.mxu0 %v633
        %v831 = vpop.f32.mrf.mxu0
        %v832 = vadd.f32 0.0, %v831
        %v833 = vpop.f32.mrf.mxu0
        %834 = vmatprep.mubr.f32.mxu0 0.0
        %835 = vmatmul.mubr.f32.gmra.mxu0 %v636
        %v836 = vpop.f32.mrf.mxu0
        %v837 = vadd.f32 0.0, %v836
        %v838 = vpop.f32.mrf.mxu0
        %839 = vmatprep.mubr.f32.mxu0 0.0
        %840 = vmatmul.mubr.f32.gmra.mxu0 %v639
        %v841 = vpop.f32.mrf.mxu0
        %v842 = vadd.f32 0.0, %v841
        %v843 = vpop.f32.mrf.mxu0
        %844 = vmatprep.mubr.f32.mxu0 0.0
        %845 = vmatmul.mubr.f32.gmra.mxu0 %v642
        %v846 = vpop.f32.mrf.mxu0
        %v847 = vadd.f32 0.0, %v846
        %v848 = vpop.f32.mrf.mxu0
        %849 = vmatprep.mubr.f32.mxu0 0.0
        %850 = vmatmul.mubr.f32.gmra.mxu0 %v645
        %v851 = vpop.f32.mrf.mxu0
        %v852 = vadd.f32 0.0, %v851
        %v853 = vpop.f32.mrf.mxu0
        %854 = vmatprep.mubr.f32.mxu0 0.0
        %855 = vmatmul.mubr.f32.gmra.mxu0 %v648
        %v856 = vpop.f32.mrf.mxu0
        %v857 = vadd.f32 0.0, %v856
        %v858 = vpop.f32.mrf.mxu0
        %859 = vmatprep.mubr.f32.mxu0 0.0
        %860 = vmatmul.mubr.f32.gmra.mxu0 %v651
        %v861 = vpop.f32.mrf.mxu0
        %v862 = vadd.f32 0.0, %v861
        %v863 = vpop.f32.mrf.mxu0
        %864 = vmatprep.mubr.f32.mxu0 0.0
        %865 = vmatmul.mubr.f32.gmra.mxu0 %v654
        %v866 = vpop.f32.mrf.mxu0
        %v867 = vadd.f32 0.0, %v866
        %v868 = vpop.f32.mrf.mxu0
        %869 = vmatprep.mubr.f32.mxu0 0.0
        %870 = vmatmul.mubr.f32.gmra.mxu0 %v657
        %v871 = vpop.f32.mrf.mxu0
        %v872 = vadd.f32 0.0, %v871
        %v873 = vpop.f32.mrf.mxu0
        %874 = vmatprep.mubr.f32.mxu0 0.0
        %875 = vmatmul.mubr.f32.gmra.mxu0 %v660
        %v876 = vpop.f32.mrf.mxu0
        %v877 = vadd.f32 0.0, %v876
        %v878 = vpop.f32.mrf.mxu0
        %879 = vmatprep.mubr.f32.mxu0 0.0
        %880 = vmatmul.mubr.f32.gmra.mxu0 %v663
        %v881 = vpop.f32.mrf.mxu0
        %v882 = vadd.f32 0.0, %v881
        %v883 = vpop.f32.mrf.mxu0
        %884 = vmatprep.mubr.f32.mxu0 0.0
        %885 = vmatmul.mubr.f32.gmra.mxu0 %v666
        %v886 = vpop.f32.mrf.mxu0
        %v887 = vadd.f32 0.0, %v886
        %v888 = vpop.f32.mrf.mxu0
        %889 = vmatprep.mubr.f32.mxu0 0.0
        %890 = vmatmul.mubr.f32.gmra.mxu0 %v669
        %v891 = vpop.f32.mrf.mxu0
        %v892 = vadd.f32 0.0, %v891
        %v893 = vpop.f32.mrf.mxu0
        %894 = vmatprep.mubr.f32.mxu0 0.0
        %895 = vmatmul.mubr.f32.gmra.mxu0 %v672
        %v896 = vpop.f32.mrf.mxu0
        %v897 = vadd.f32 0.0, %v896
        %v898 = vpop.f32.mrf.mxu0
        %899 = vmatprep.mubr.f32.mxu0 0.0
        %900 = vmatmul.mubr.f32.gmra.mxu0 %v675
        %v901 = vpop.f32.mrf.mxu0
        %v902 = vadd.f32 0.0, %v901
        %v903 = vpop.f32.mrf.mxu0
        %904 = vdwg.mxu0
        %v905 = vmax.f32 %v747, %v767
        %v906 = vmax.f32 %v752, %v772
        %v907 = vmax.f32 %v757, %v777
        %v908 = vmax.f32 %v762, %v782
        %v909 = vmax.f32 %v905, %v787
        %v910 = vmax.f32 %v906, %v792
        %v911 = vmax.f32 %v907, %v797
        %v912 = vmax.f32 %v908, %v802
        %v913 = vmax.f32 %v909, %v807
        %v914 = vmax.f32 %v910, %v812
        %v915 = vmax.f32 %v911, %v817
        %v916 = vmax.f32 %v912, %v822
        %v917 = vmax.f32 %v913, %v827
        %v918 = vmax.f32 %v914, %v832
        %v919 = vmax.f32 %v915, %v837
        %v920 = vmax.f32 %v916, %v842
        %v921 = vmax.f32 %v917, %v847
        %v922 = vmax.f32 %v918, %v852
        %v923 = vmax.f32 %v919, %v857
        %v924 = vmax.f32 %v920, %v862
        %v925 = vmax.f32 %v921, %v867
        %v926 = vmax.f32 %v922, %v872
        %v927 = vmax.f32 %v923, %v877
        %v928 = vmax.f32 %v924, %v882
        %v929 = vmax.f32 %v925, %v887
        %v930 = vmax.f32 %v926, %v892
        %v931 = vmax.f32 %v927, %v897
        %v932 = vmax.f32 %v928, %v902
        %v933 = vmax.f32 %v929, %v930
        %v934 = vmax.f32 %v931, %v932
        %v935 = vmax.f32 %v933, %v934
        %v936 = vrot.slane %v935, 4
        %v937 = vmax.f32 %v935, %v936
        %v938 = vrot.slane %v937, 2
        %v939 = vmax.f32 %v937, %v938
        %v940 = vrot.slane %v939, 1
        %v941 = vmax.f32 %v939, %v940
        %v942 = vsub.f32 %v747, %v941
        %v943 = vsub.f32 %v752, %v941
        %v944 = vsub.f32 %v757, %v941
        %v945 = vsub.f32 %v762, %v941
        %v946 = vsub.f32 %v767, %v941
        %v947 = vsub.f32 %v772, %v941
        %v948 = vsub.f32 %v777, %v941
        %v949 = vsub.f32 %v782, %v941
        %v950 = vsub.f32 %v787, %v941
        %v951 = vsub.f32 %v792, %v941
        %v952 = vsub.f32 %v797, %v941
        %v953 = vsub.f32 %v802, %v941
        %v954 = vsub.f32 %v807, %v941
        %v955 = vsub.f32 %v812, %v941
        %v956 = vsub.f32 %v817, %v941
        %v957 = vsub.f32 %v822, %v941
        %v958 = vsub.f32 %v827, %v941
        %v959 = vsub.f32 %v832, %v941
        %v960 = vsub.f32 %v837, %v941
        %v961 = vsub.f32 %v842, %v941
        %v962 = vsub.f32 %v847, %v941
        %v963 = vsub.f32 %v852, %v941
        %v964 = vsub.f32 %v857, %v941
        %v965 = vsub.f32 %v862, %v941
        %v966 = vsub.f32 %v867, %v941
        %v967 = vsub.f32 %v872, %v941
        %v968 = vsub.f32 %v877, %v941
        %v969 = vsub.f32 %v882, %v941
        %v970 = vsub.f32 %v887, %v941
        %v971 = vsub.f32 %v892, %v941
        %v972 = vsub.f32 %v897, %v941
        %v973 = vsub.f32 %v902, %v941
        %v974 = vmul.f32 %v942, 1.442695
        %v975 = vpow.pop %v974
        %v976 = vmul.f32 %v943, 1.442695
        %v977 = vpow.pop %v976
        %v978 = vmul.f32 %v944, 1.442695
        %v979 = vpow.pop %v978
        %v980 = vmul.f32 %v945, 1.442695
        %v981 = vpow.pop %v980
        %v982 = vmul.f32 %v946, 1.442695
        %v983 = vpow.pop %v982
        %v984 = vmul.f32 %v947, 1.442695
        %v985 = vpow.pop %v984
        %v986 = vmul.f32 %v948, 1.442695
        %v987 = vpow.pop %v986
        %v988 = vmul.f32 %v949, 1.442695
        %v989 = vpow.pop %v988
        %v990 = vmul.f32 %v950, 1.442695
        %v991 = vpow.pop %v990
        %v992 = vmul.f32 %v951, 1.442695
        %v993 = vpow.pop %v992
        %v994 = vmul.f32 %v952, 1.442695
        %v995 = vpow.pop %v994
        %v996 = vmul.f32 %v953, 1.442695
        %v997 = vpow.pop %v996
        %v998 = vmul.f32 %v954, 1.442695
        %v999 = vpow.pop %v998
        %v1000 = vmul.f32 %v955, 1.442695
        %v1001 = vpow.pop %v1000
        %v1002 = vmul.f32 %v956, 1.442695
        %v1003 = vpow.pop %v1002
        %v1004 = vmul.f32 %v957, 1.442695
        %v1005 = vpow.pop %v1004
        %v1006 = vmul.f32 %v958, 1.442695
        %v1007 = vpow.pop %v1006
        %v1008 = vmul.f32 %v959, 1.442695
        %v1009 = vpow.pop %v1008
        %v1010 = vmul.f32 %v960, 1.442695
        %v1011 = vpow.pop %v1010
        %v1012 = vmul.f32 %v961, 1.442695
        %v1013 = vpow.pop %v1012
        %v1014 = vmul.f32 %v962, 1.442695
        %v1015 = vpow.pop %v1014
        %v1016 = vmul.f32 %v963, 1.442695
        %v1017 = vpow.pop %v1016
        %v1018 = vmul.f32 %v964, 1.442695
        %v1019 = vpow.pop %v1018
        %v1020 = vmul.f32 %v965, 1.442695
        %v1021 = vpow.pop %v1020
        %v1022 = vmul.f32 %v966, 1.442695
        %v1023 = vpow.pop %v1022
        %v1024 = vmul.f32 %v967, 1.442695
        %v1025 = vpow.pop %v1024
        %v1026 = vmul.f32 %v968, 1.442695
        %v1027 = vpow.pop %v1026
        %v1028 = vmul.f32 %v969, 1.442695
        %v1029 = vpow.pop %v1028
        %v1030 = vmul.f32 %v970, 1.442695
        %v1031 = vpow.pop %v1030
        %v1032 = vmul.f32 %v971, 1.442695
        %v1033 = vpow.pop %v1032
        %v1034 = vmul.f32 %v972, 1.442695
        %v1035 = vpow.pop %v1034
        %v1036 = vmul.f32 %v973, 1.442695
        %v1037 = vpow.pop %v1036
        %v1038 = vadd.f32 %v975, %v977
        %v1039 = vadd.f32 %v1038, %v979
        %v1040 = vadd.f32 %v1039, %v981
        %v1041 = vadd.f32 %v1040, %v983
        %v1042 = vadd.f32 %v1041, %v985
        %v1043 = vadd.f32 %v1042, %v987
        %v1044 = vadd.f32 %v1043, %v989
        %v1045 = vadd.f32 %v1044, %v991
        %v1046 = vadd.f32 %v1045, %v993
        %v1047 = vadd.f32 %v1046, %v995
        %v1048 = vadd.f32 %v1047, %v997
        %v1049 = vadd.f32 %v1048, %v999
        %v1050 = vadd.f32 %v1049, %v1001
        %v1051 = vadd.f32 %v1050, %v1003
        %v1052 = vadd.f32 %v1051, %v1005
        %v1053 = vadd.f32 %v1052, %v1007
        %v1054 = vadd.f32 %v1053, %v1009
        %v1055 = vadd.f32 %v1054, %v1011
        %v1056 = vadd.f32 %v1055, %v1013
        %v1057 = vadd.f32 %v1056, %v1015
        %v1058 = vadd.f32 %v1057, %v1017
        %v1059 = vadd.f32 %v1058, %v1019
        %v1060 = vadd.f32 %v1059, %v1021
        %v1061 = vadd.f32 %v1060, %v1023
        %v1062 = vadd.f32 %v1061, %v1025
        %v1063 = vadd.f32 %v1062, %v1027
        %v1064 = vadd.f32 %v1063, %v1029
        %v1065 = vadd.f32 %v1064, %v1031
        %v1066 = vadd.f32 %v1065, %v1033
        %v1067 = vadd.f32 %v1066, %v1035
        %v1068 = vadd.f32 %v1067, %v1037
        %v1069 = vrot.slane %v1068, 4
        %v1070 = vadd.f32 %v1068, %v1069
        %v1071 = vrot.slane %v1070, 2
        %v1072 = vadd.f32 %v1070, %v1071
        %v1073 = vrot.slane %v1072, 1
        %v1074 = vadd.f32 %v1072, %v1073
        %v1075 = vrcp.pop %v1074
        %v1076 = vmul.f32 1.0, %v1075
        %v1078 = vcombine.high %v267, %v267
        %1080 = vmatprep.subr.mxu0 0.0
        %1081 = vmatpush1.msra.mxu0 %v1005
        %1082 = vmatprep.subr.mxu0 0.0
        %1083 = vmatpush1.msra.mxu0 %v1003
        %1084 = vmatprep.subr.mxu0 0.0
        %1085 = vmatpush1.msra.mxu0 %v1001
        %1086 = vmatprep.subr.mxu0 0.0
        %1087 = vmatpush1.msra.mxu0 %v999
        %1088 = vmatprep.subr.mxu0 0.0
        %1089 = vmatpush1.msra.mxu0 %v997
        %1090 = vmatprep.subr.mxu0 0.0
        %1091 = vmatpush1.msra.mxu0 %v995
        %1092 = vmatprep.subr.mxu0 0.0
        %1093 = vmatpush1.msra.mxu0 %v993
        %1094 = vmatprep.subr.mxu0 0.0
        %1095 = vmatpush1.msra.mxu0 %v991
        %1096 = vmatprep.subr.mxu0 0.0
        %1097 = vmatpush1.msra.mxu0 %v989
        %1098 = vmatprep.subr.mxu0 0.0
        %1099 = vmatpush1.msra.mxu0 %v987
        %1100 = vmatprep.subr.mxu0 0.0
        %1101 = vmatpush1.msra.mxu0 %v985
        %1102 = vmatprep.subr.mxu0 0.0
        %1103 = vmatpush1.msra.mxu0 %v983
        %1104 = vmatprep.subr.mxu0 0.0
        %1105 = vmatpush1.msra.mxu0 %v981
        %1106 = vmatprep.subr.mxu0 0.0
        %1107 = vmatpush1.msra.mxu0 %v979
        %1108 = vmatprep.subr.mxu0 0.0
        %1109 = vmatpush1.msra.mxu0 %v977
        %1110 = vmatprep.subr.mxu0 0.0
        %1111 = vmatpush1.msra.mxu0 %v975
        %1112 = vmatprep.subr.mxu0 0.0
        %1113 = vmatpush2.msra.mxu0 %v1037
        %1114 = vmatprep.subr.mxu0 0.0
        %1115 = vmatpush2.msra.mxu0 %v1035
        %1116 = vmatprep.subr.mxu0 0.0
        %1117 = vmatpush2.msra.mxu0 %v1033
        %1118 = vmatprep.subr.mxu0 0.0
        %1119 = vmatpush2.msra.mxu0 %v1031
        %1120 = vmatprep.subr.mxu0 0.0
        %1121 = vmatpush2.msra.mxu0 %v1029
        %1122 = vmatprep.subr.mxu0 0.0
        %1123 = vmatpush2.msra.mxu0 %v1027
        %1124 = vmatprep.subr.mxu0 0.0
        %1125 = vmatpush2.msra.mxu0 %v1025
        %1126 = vmatprep.subr.mxu0 0.0
        %1127 = vmatpush2.msra.mxu0 %v1023
        %1128 = vmatprep.subr.mxu0 0.0
        %1129 = vmatpush2.msra.mxu0 %v1021
        %1130 = vmatprep.subr.mxu0 0.0
        %1131 = vmatpush2.msra.mxu0 %v1019
        %1132 = vmatprep.subr.mxu0 0.0
        %1133 = vmatpush2.msra.mxu0 %v1017
        %1134 = vmatprep.subr.mxu0 0.0
        %1135 = vmatpush2.msra.mxu0 %v1015
        %1136 = vmatprep.subr.mxu0 0.0
        %1137 = vmatpush2.msra.mxu0 %v1013
        %1138 = vmatprep.subr.mxu0 0.0
        %1139 = vmatpush2.msra.mxu0 %v1011
        %1140 = vmatprep.subr.mxu0 0.0
        %1141 = vmatpush2.msra.mxu0 %v1009
        %1142 = vmatprep.subr.mxu0 0.0
        %1143 = vmatpush2.msra.mxu0 %v1007
        %1144 = vmatprep.mubr.f32.mxu0 %v1078
        %1145 = vmatmul.mubr.f32.gmra.mxu0 %v267
        %v1146 = vpop.f32.mrf.mxu0
        %v1147 = vadd.f32 0.0, %v1146
        %v1148 = vpop.f32.mrf.mxu0
        %1149 = vdwg.mxu0
        %v1150 = vmul.f32 %v1147, %v1076
        %1151 = vst [vmem:[%s165] sm:$0xf] %v1150
        %s1152 = sand.u32 %s90, 1
        %s1153 = scalar_lea.sflag [#allocation4], %s1152
        %s1154 = sand.u32 %s90, 1
        %s1155 = smul.addr %s1154, 4
        %s1156 = scalar_lea.vmem [#allocation3], %s1155
        // Predicated region
        $region29: #{tpu_custom_call.1} parent=27 // pred_check
          %p1157 = pneg %p100
        $region30: #{tpu_custom_call.1} parent=27 // pred_check_branch
          %1159 = sbr.rel (%p1157) target = $region32
        $region31: #{tpu_custom_call.1} parent=27 // pred_region
          %s1161 = ssub.s32 64, 64
          %1162 = vsyncadd %s1153, %s1161
          %s1163 = smul.addr %s20, 2
          %s1164 = sadd.s32 %s21, %s1163
          %s1165 = smul.addr %s1164, 64
          %s1166 = scalar_lea.hbm %s2, %s1165
          %s1168 = sshll.u32 %s1156, 4
          %s1169 = int_to_ptr.vmem [resolvable:$true] %s1168
          %1171 = dma.vmem_to_hbm [thread:$0]  %s1169, 64, %s1166, %s1153
        $region32: #{tpu_custom_call.1} parent=27 // pred_fallthru
          _
      $region28: #{tpu_custom_call.1} parent=5 // pred_fallthru
        _
      %p1172 = scmp.le.s32.totalorder 2, %s11
      // Predicated region
      $region33: #{tpu_custom_call.1} parent=5 // pred_check
        %p1173 = pneg %p1172
      $region34: #{tpu_custom_call.1} parent=5 // pred_check_branch
        %1175 = sbr.rel (%p1173) target = $region36
      $region35: #{tpu_custom_call.1} parent=5 // pred_region
        %s1176 = ssub.s32 %s11, 2
        // Predicated region
        $region37: #{tpu_custom_call.1} parent=35 // pred_check
          %p1177 = pneg %p106
        $region38: #{tpu_custom_call.1} parent=35 // pred_check_branch
          %1179 = sbr.rel (%p1177) target = $region40
        $region39: #{tpu_custom_call.1} parent=35 // pred_region
          %s1180 = sand.u32 %s91, 1
          %s1181 = scalar_lea.sflag [#allocation4], %s1180
          %s1182 = sand.u32 %s91, 1
          %s1183 = smul.addr %s1182, 4
          %s1184 = scalar_lea.vmem [#allocation3], %s1183
          %1185 = dma.done %s1181, 64
        $region40: #{tpu_custom_call.1} parent=35 // pred_fallthru
          _
      $region36: #{tpu_custom_call.1} parent=5 // pred_fallthru
        _
    $region6: #{tpu_custom_call.1} parent=1 // loop_footer
      %s15 = sadd.s32 1, %s11
    $region7: #{tpu_custom_call.1} parent=1 // loop_footer_branch
      %10 = sbr.rel target = $region3
    $region8: #{tpu_custom_call.1} parent=1 // loop_exit
      _
    %1186 = vsyncpa [#allocation4], 1
    %s1187 = scalar_lea.sflag [#allocation4], 1
    %1188 = vsyncpa %s1187, 1

</llo_original>
